<compile_context>
chip_gen: v7x
topology: tpu7x:2x2x1
jax: 0.10.0
libtpu: 0.0.40
codegen_flags: <defaults>
</compile_context>

<pallas_src>
import functools

import jax
import jax.numpy as jnp
from jax.experimental import pallas as pl
from jax.experimental.pallas import tpu as pltpu


def _round_up(x, m):
    return (x + m - 1) // m * m


def _pick_tile_rows(Hl, Wl, max_rows_cap=256, target_bytes=2 << 20):
    """Largest multiple of 8 that divides Hl, capped by max_rows_cap and by a
    ~2 MiB per-block VMEM budget (keeps double-buffered in+out blocks well
    under the 16/32 MiB scoped-VMEM defaults on v5e/v6e/v7x)."""
    bytes_cap = max(8, (target_bytes // (Wl * 4)) // 8 * 8)
    cap = max(8, min(Hl, max_rows_cap, bytes_cap))
    best = 8
    for t in range(8, cap + 1, 8):
        if Hl % t == 0:
            best = t
    return best


def sobelxy_kernel(x_ref, top_ref, bot_ref, o_ref):
    """One (TH, Wl) row tile of one (batch*channel) plane.

    x_ref   : (1, TH, Wl) tile rows
    top_ref : (1, 8, Wl)  8-row slab directly above the tile (last row = halo)
    bot_ref : (1, 8, Wl)  8-row slab directly below the tile (first row = halo)
    o_ref   : (1, TH, Wl) output tile
    """
    i = pl.program_id(1)
    n_i = pl.num_programs(1)

    x = x_ref[0]                       # (TH, Wl) f32
    TH, Wl = x.shape

    # Halo rows; the true image border uses the convolution's zero padding.
    row_above = jnp.where(i > 0, top_ref[0, 7:8, :], 0.0)        # (1, Wl)
    row_below = jnp.where(i < n_i - 1, bot_ref[0, 0:1, :], 0.0)  # (1, Wl)

    row_ids = jax.lax.broadcasted_iota(jnp.int32, (TH, Wl), 0)
    col_ids = jax.lax.broadcasted_iota(jnp.int32, (TH, Wl), 1)

    # Vertical neighbours via sublane roll (XLU); boundary rows patched from halo.
    x_up = jnp.where(row_ids == 0, row_above,
                     pltpu.roll(x, shift=1, axis=0))        # x[i-1, j]
    x_dn = jnp.where(row_ids == TH - 1, row_below,
                     pltpu.roll(x, shift=TH - 1, axis=0))    # x[i+1, j]

    # Separable Sobel, vertical pass first.
    p = x_up + 2.0 * x + x_dn          # [1,2,1]  vertical smooth (for sobelx)
    q = x_up - x_dn                    # [1,0,-1] vertical diff   (for sobely)

    # Horizontal pass via lane roll (XLU); wrapped border column is the zero pad.
    p_l = jnp.where(col_ids == 0, 0.0, pltpu.roll(p, shift=1, axis=1))
    p_r = jnp.where(col_ids == Wl - 1, 0.0, pltpu.roll(p, shift=Wl - 1, axis=1))
    q_l = jnp.where(col_ids == 0, 0.0, pltpu.roll(q, shift=1, axis=1))
    q_r = jnp.where(col_ids == Wl - 1, 0.0, pltpu.roll(q, shift=Wl - 1, axis=1))

    sobelx = p_r - p_l                 # horizontal [-1,0,1] of p
    sobely = q_l + 2.0 * q + q_r       # horizontal [ 1,2,1] of q
    o_ref[0] = (sobelx + sobely).astype(o_ref.dtype)


@functools.partial(jax.jit, static_argnames=("max_tile_rows",))
def sobelxy(x, max_tile_rows=256):
    """x: (B, C, H, W) -> (B, C, H, W), equals F.conv2d(x,kx,pad=1)+F.conv2d(x,ky,pad=1)."""
    B, C, H, W = x.shape
    xf = x.reshape(B * C, H, W).astype(jnp.float32)

    Hl = _round_up(H, 8)               # sublane-aligned rows
    Wl = _round_up(W, 128)             # lane-dense columns
    TH = _pick_tile_rows(Hl, Wl, max_rows_cap=max_tile_rows)
    n_rows = Hl // TH
    n_slabs = Hl // 8
    kb = TH // 8                       # 8-row slabs per row tile

    # Alignment-only zero padding (identity when H%8==0 and W%128==0).  The
    # extra zero rows/cols coincide with the convolution's own zero padding, so
    # real output pixels are unaffected; padded outputs are sliced off below.
    xp = jnp.pad(xf, ((0, 0), (0, Hl - H), (0, Wl - W)))

    main_spec = pl.BlockSpec((1, TH, Wl), lambda b, i: (b, i, 0))
    top_spec = pl.BlockSpec(
        (1, 8, Wl), lambda b, i: (b, jnp.maximum(i * kb - 1, 0), 0))
    bot_spec = pl.BlockSpec(
        (1, 8, Wl), lambda b, i: (b, jnp.minimum((i + 1) * kb, n_slabs - 1), 0))
    out_spec = pl.BlockSpec((1, TH, Wl), lambda b, i: (b, i, 0))

    out = pl.pallas_call(
        sobelxy_kernel,
        out_shape=jax.ShapeDtypeStruct((B * C, Hl, Wl), jnp.float32),
        grid_spec=pltpu.PrefetchScalarGridSpec(
            num_scalar_prefetch=0,
            grid=(B * C, n_rows),
            in_specs=[main_spec, top_spec, bot_spec],
            out_specs=out_spec,
        ),
        compiler_params=pltpu.CompilerParams(
            dimension_semantics=("parallel", "parallel")),
    )(xp, xp, xp)

    return out[:, :H, :W].reshape(B, C, H, W).astype(x.dtype)


def _sobelxy_ref(x):
    """Pure-JAX reference: zero-padded 3x3 cross-correlation, summed kernels."""
    kx = ((-1.0, 0.0, 1.0), (-2.0, 0.0, 2.0), (-1.0, 0.0, 1.0))
    ky = ((1.0, 2.0, 1.0), (0.0, 0.0, 0.0), (-1.0, -2.0, -1.0))
    B, C, H, W = x.shape
    xp = jnp.pad(x.astype(jnp.float32), ((0, 0), (0, 0), (1, 1), (1, 1)))
    out = jnp.zeros((B, C, H, W), jnp.float32)
    for di in range(3):
        for dj in range(3):
            c = kx[di][dj] + ky[di][dj]
            if c == 0.0:
                continue
            out = out + c * xp[:, :, di:di + H, dj:dj + W]
    return out


if __name__ == "__main__":
    key = jax.random.PRNGKey(0)
    k1, k2 = jax.random.split(key)

    # Shape implied by the module's forward: (B, 1, H, W).
    B, C, H, W = 2, 1, 16, 16
    x = jax.random.uniform(k1, (B, C, H, W), dtype=jnp.float32)
    out = sobelxy(x)
    jax.block_until_ready(out)
    ref = _sobelxy_ref(x)
    assert out.shape == ref.shape
    err = float(jnp.max(jnp.abs(out - ref)))
    assert jnp.allclose(out, ref, atol=1e-4, rtol=1e-4), err

    # Second case exercising multi-row-tile halos and non-128 W (48 rows split
    # into 3 tiles of 16 rows, W=144 padded to 256 lanes).
    x2 = jax.random.uniform(k2, (1, 1, 48, 144), dtype=jnp.float32)
    out2 = sobelxy(x2, max_tile_rows=16)
    jax.block_until_ready(out2)
    ref2 = _sobelxy_ref(x2)
    err2 = float(jnp.max(jnp.abs(out2 - ref2)))
    assert jnp.allclose(out2, ref2, atol=1e-4, rtol=1e-4), err2

    print("KERNEL_OK")
</pallas_src>

<mosaic_0001>
module attributes {stable_mosaic.version = 11 : i64} {
  func.func @sobelxy_kernel(%arg0: i32, %arg1: i32, %arg2: memref<1x16x128xf32, #tpu.memory_space<vmem>>, %arg3: memref<1x8x128xf32, #tpu.memory_space<vmem>>, %arg4: memref<1x8x128xf32, #tpu.memory_space<vmem>>, %arg5: memref<1x16x128xf32, #tpu.memory_space<vmem>>) attributes {dimension_semantics = [#tpu.dimension_semantics<parallel>, #tpu.dimension_semantics<parallel>], iteration_bounds = array<i64: 2, 1>, scalar_prefetch = 0 : i64, scratch_operands = 0 : i64, tpu.core_type = #tpu.core_type<tc>, window_params = [{transform_indices = @transform_0, window_bounds = array<i64: 1, 16, 128>}, {transform_indices = @transform_1, window_bounds = array<i64: 1, 8, 128>}, {transform_indices = @transform_2, window_bounds = array<i64: 1, 8, 128>}, {transform_indices = @transform_3, window_bounds = array<i64: 1, 16, 128>}]} {
    %c0 = arith.constant 0 : index
    %c0_0 = arith.constant 0 : index
    %c0_1 = arith.constant 0 : index
    %0 = vector.load %arg2[%c0, %c0_0, %c0_1] : memref<1x16x128xf32, #tpu.memory_space<vmem>>, vector<1x16x128xf32>
    %1 = vector.shape_cast %0 : vector<1x16x128xf32> to vector<16x128xf32>
    %c0_i32 = arith.constant 0 : i32
    %2 = arith.cmpi sgt, %arg1, %c0_i32 : i32
    %c0_2 = arith.constant 0 : index
    %c7 = arith.constant 7 : index
    %c0_3 = arith.constant 0 : index
    %3 = vector.load %arg3[%c0_2, %c7, %c0_3] : memref<1x8x128xf32, #tpu.memory_space<vmem>>, vector<1x1x128xf32>
    %4 = vector.shape_cast %3 : vector<1x1x128xf32> to vector<1x128xf32>
    %cst = arith.constant 0.000000e+00 : f32
    %5 = vector.broadcast %cst : f32 to vector<1x128xf32>
    %6 = arith.select %2, %4, %5 : vector<1x128xf32>
    %c0_i32_4 = arith.constant 0 : i32
    %7 = arith.cmpi slt, %arg1, %c0_i32_4 : i32
    %c0_5 = arith.constant 0 : index
    %c0_6 = arith.constant 0 : index
    %c0_7 = arith.constant 0 : index
    %8 = vector.load %arg4[%c0_5, %c0_6, %c0_7] : memref<1x8x128xf32, #tpu.memory_space<vmem>>, vector<1x1x128xf32>
    %9 = vector.shape_cast %8 : vector<1x1x128xf32> to vector<1x128xf32>
    %cst_8 = arith.constant 0.000000e+00 : f32
    %10 = vector.broadcast %cst_8 : f32 to vector<1x128xf32>
    %11 = arith.select %7, %9, %10 : vector<1x128xf32>
    %12 = tpu.iota {dimensions = array<i32: 0>} : vector<16x128xi32>
    %13 = tpu.iota {dimensions = array<i32: 1>} : vector<16x128xi32>
    %c0_i32_9 = arith.constant 0 : i32
    %14 = vector.broadcast %c0_i32_9 : i32 to vector<16x128xi32>
    %15 = arith.cmpi eq, %12, %14 : vector<16x128xi32>
    %c1_i32 = arith.constant 1 : i32
    %16 = tpu.dynamic_rotate %1 by %c1_i32 dim 0 : vector<16x128xf32>, i32 -> vector<16x128xf32>
    %17 = vector.shape_cast %6 : vector<1x128xf32> to vector<1x128xf32>
    %18 = vector.broadcast %17 : vector<1x128xf32> to vector<16x128xf32>
    %19 = arith.select %15, %18, %16 : vector<16x128xi1>, vector<16x128xf32>
    %c15_i32 = arith.constant 15 : i32
    %20 = vector.broadcast %c15_i32 : i32 to vector<16x128xi32>
    %21 = arith.cmpi eq, %12, %20 : vector<16x128xi32>
    %c15_i32_10 = arith.constant 15 : i32
    %22 = tpu.dynamic_rotate %1 by %c15_i32_10 dim 0 : vector<16x128xf32>, i32 -> vector<16x128xf32>
    %23 = vector.shape_cast %11 : vector<1x128xf32> to vector<1x128xf32>
    %24 = vector.broadcast %23 : vector<1x128xf32> to vector<16x128xf32>
    %25 = arith.select %21, %24, %22 : vector<16x128xi1>, vector<16x128xf32>
    %cst_11 = arith.constant 2.000000e+00 : f32
    %26 = vector.broadcast %cst_11 : f32 to vector<16x128xf32>
    %27 = arith.mulf %26, %1 : vector<16x128xf32>
    %28 = arith.addf %19, %27 : vector<16x128xf32>
    %29 = arith.addf %28, %25 : vector<16x128xf32>
    %30 = arith.subf %19, %25 : vector<16x128xf32>
    %c0_i32_12 = arith.constant 0 : i32
    %31 = vector.broadcast %c0_i32_12 : i32 to vector<16x128xi32>
    %32 = arith.cmpi eq, %13, %31 : vector<16x128xi32>
    %c1_i32_13 = arith.constant 1 : i32
    %33 = tpu.dynamic_rotate %29 by %c1_i32_13 dim 1 : vector<16x128xf32>, i32 -> vector<16x128xf32>
    %cst_14 = arith.constant 0.000000e+00 : f32
    %34 = vector.broadcast %cst_14 : f32 to vector<16x128xf32>
    %35 = arith.select %32, %34, %33 : vector<16x128xi1>, vector<16x128xf32>
    %c127_i32 = arith.constant 127 : i32
    %36 = vector.broadcast %c127_i32 : i32 to vector<16x128xi32>
    %37 = arith.cmpi eq, %13, %36 : vector<16x128xi32>
    %c127_i32_15 = arith.constant 127 : i32
    %38 = tpu.dynamic_rotate %29 by %c127_i32_15 dim 1 : vector<16x128xf32>, i32 -> vector<16x128xf32>
    %cst_16 = arith.constant 0.000000e+00 : f32
    %39 = vector.broadcast %cst_16 : f32 to vector<16x128xf32>
    %40 = arith.select %37, %39, %38 : vector<16x128xi1>, vector<16x128xf32>
    %c0_i32_17 = arith.constant 0 : i32
    %41 = vector.broadcast %c0_i32_17 : i32 to vector<16x128xi32>
    %42 = arith.cmpi eq, %13, %41 : vector<16x128xi32>
    %c1_i32_18 = arith.constant 1 : i32
    %43 = tpu.dynamic_rotate %30 by %c1_i32_18 dim 1 : vector<16x128xf32>, i32 -> vector<16x128xf32>
    %cst_19 = arith.constant 0.000000e+00 : f32
    %44 = vector.broadcast %cst_19 : f32 to vector<16x128xf32>
    %45 = arith.select %42, %44, %43 : vector<16x128xi1>, vector<16x128xf32>
    %c127_i32_20 = arith.constant 127 : i32
    %46 = vector.broadcast %c127_i32_20 : i32 to vector<16x128xi32>
    %47 = arith.cmpi eq, %13, %46 : vector<16x128xi32>
    %c127_i32_21 = arith.constant 127 : i32
    %48 = tpu.dynamic_rotate %30 by %c127_i32_21 dim 1 : vector<16x128xf32>, i32 -> vector<16x128xf32>
    %cst_22 = arith.constant 0.000000e+00 : f32
    %49 = vector.broadcast %cst_22 : f32 to vector<16x128xf32>
    %50 = arith.select %47, %49, %48 : vector<16x128xi1>, vector<16x128xf32>
    %51 = arith.subf %40, %35 : vector<16x128xf32>
    %cst_23 = arith.constant 2.000000e+00 : f32
    %52 = vector.broadcast %cst_23 : f32 to vector<16x128xf32>
    %53 = arith.mulf %52, %30 : vector<16x128xf32>
    %54 = arith.addf %45, %53 : vector<16x128xf32>
    %55 = arith.addf %54, %50 : vector<16x128xf32>
    %56 = arith.addf %51, %55 : vector<16x128xf32>
    %c0_24 = arith.constant 0 : index
    %c0_25 = arith.constant 0 : index
    %c0_26 = arith.constant 0 : index
    %57 = vector.load %arg5[%c0_24, %c0_25, %c0_26] : memref<1x16x128xf32, #tpu.memory_space<vmem>>, vector<1x16x128xf32>
    %58 = vector.shape_cast %57 : vector<1x16x128xf32> to vector<16x128xf32>
    %59 = vector.shape_cast %56 : vector<16x128xf32> to vector<1x16x128xf32>
    tpu.vector_store %arg5[%c0_24, %c0_25, %c0_26], %59 {strides = array<i32>} : memref<1x16x128xf32, #tpu.memory_space<vmem>>, vector<1x16x128xf32>,
    return
  }
  func.func @transform_0(%arg0: i32, %arg1: i32) -> (i32, i32, i32) {
    %c0_i32 = arith.constant 0 : i32
    %c0_i32_0 = arith.constant 0 : i32
    return %arg0, %arg1, %c0_i32 : i32, i32, i32
  }
  func.func @transform_1(%arg0: i32, %arg1: i32) -> (i32, i32, i32) {
    %c2_i32 = arith.constant 2 : i32
    %0 = arith.muli %arg1, %c2_i32 : i32
    %c1_i32 = arith.constant 1 : i32
    %1 = arith.subi %0, %c1_i32 : i32
    %c0_i32 = arith.constant 0 : i32
    %2 = arith.maxsi %1, %c0_i32 : i32
    %c0_i32_0 = arith.constant 0 : i32
    %c0_i32_1 = arith.constant 0 : i32
    return %arg0, %2, %c0_i32_0 : i32, i32, i32
  }
  func.func @transform_2(%arg0: i32, %arg1: i32) -> (i32, i32, i32) {
    %c1_i32 = arith.constant 1 : i32
    %0 = arith.addi %arg1, %c1_i32 : i32
    %c2_i32 = arith.constant 2 : i32
    %1 = arith.muli %0, %c2_i32 : i32
    %c1_i32_0 = arith.constant 1 : i32
    %2 = arith.minsi %1, %c1_i32_0 : i32
    %c0_i32 = arith.constant 0 : i32
    %c0_i32_1 = arith.constant 0 : i32
    return %arg0, %2, %c0_i32 : i32, i32, i32
  }
  func.func @transform_3(%arg0: i32, %arg1: i32) -> (i32, i32, i32) {
    %c0_i32 = arith.constant 0 : i32
    %c0_i32_0 = arith.constant 0 : i32
    return %arg0, %arg1, %c0_i32 : i32, i32, i32
  }
}

</mosaic_0001>

<llo_original>
// kernel: sobelxy.1
$region0: #{sobelxy.1}
  #allocation0 [shape = 'u32[]', space=smem, size = 0x4, offset = 0x4, fixed_abs, tag = 'smem constant byte address 0x4 - core index']
  #allocation1 [shape = 'u32[144,128]{1,0:T(1,128)}', space=vmem, size = 0x12000, scoped, tag = 'internal scratch']
  %s0 = inlined_call_operand.vmem [shape: f32[2,16,128], index: 0, kind: input, shape index: {}, may-alias: {0,1,2}]
  %s1 = inlined_call_operand.vmem [shape: f32[2,16,128], index: 1, kind: input, shape index: {}, may-alias: {0,1,2}]
  %s2 = inlined_call_operand.vmem [shape: f32[2,16,128], index: 2, kind: input, shape index: {}, may-alias: {0,1,2}]
  %s3 = inlined_call_operand.vmem [shape: f32[2,16,128], index: 3, kind: output, shape index: {}]
  %s4 = sld [smem:[#allocation0]]
  $region45: #{sobelxy.1} parent=0
    _
  %s6 = ssub.s32 1, %s4
  %s7 = scalar_select 0, %s6, %s4
  loop: start=0, step=1, limit=4
  $region2: #{sobelxy.1} parent=0 // loop_pre_header
    _
  $region3: #{sobelxy.1} parent=0 // loop_header
    %s9 = sphi 0, %s13
    %p10 = scmp.ge.s32.totalorder %s9, 4
    %s16 = sphi 0, %s28
    %s17 = sphi 0, %s24
    %s18 = sphi 0, %s16
    %s19 = sphi 0, %s17
    %s20 = sphi 0, %s18
    %s21 = sphi 0, %s19
    %s33 = sphi 0, %s35
    %s36 = sphi 0, %s33
    %s37 = sphi 0, %s36
    %s53 = sphi 0, %s37
    %s69 = sphi 0, %s71
    %s72 = sphi 0, %s69
    %s73 = sphi 0, %s72
    %s89 = sphi 0, %s73
    %s105 = sphi 0, %s107
    %s108 = sphi 0, %s105
    %s109 = sphi 0, %s108
    %s125 = sphi 0, %s109
    %s133 = sphi 0, %s135
    %s136 = sphi 0, %s133
    %s137 = sphi 0, %s136
    %s153 = sphi 0, %s137
  $region4: #{sobelxy.1} parent=0 // loop_header_branch
    %12 = sbr.rel (%p10) target = $region8
  $region5: #{sobelxy.1} parent=0 // loop_body
    %s14 = ssub.s32 %s9, 1
    %s15 = ssub.s32 %s9, 2
    %s22 = sadd.s32 1, %s17
    %p23 = scmp.ge.s32.totalorder %s22, 1
    %s24 = scalar_select %p23, 0, %s22
    %s25 = sadd.s32 1, %s16
    %s26 = scalar_select %p23, %s25, %s16
    %p27 = scmp.ge.s32.totalorder %s26, 2
    %s28 = scalar_select %p27, 0, %s26
    %s29 = ssub.s32 %s16, %s28
    %s30 = ssub.s32 %s17, %s24
    %s31 = sor.u32 %s29, %s30
    %p32 = scmp.eq.s32.totalorder %s31, 0
    %s34 = sadd.s32 %s33, 1
    %s35 = scalar_select %p32, %s33, %s34
    %p38 = pneg %p32
    %p39 = scmp.eq.s32.totalorder %s9, 1
    %p40 = por %p38, %p39
    %p41 = scmp.ne.s32.totalorder %s33, %s36
    %p42 = scmp.eq.s32.totalorder %s9, 0
    %p43 = por %p41, %p42
    %p44 = scmp.ne.s32.totalorder %s33, %s36
    %p45 = scmp.eq.s32.totalorder %s14, 1
    %p46 = por %p44, %p45
    %p47 = scmp.ne.s32.totalorder %s36, %s37
    %p48 = scmp.eq.s32.totalorder %s14, 0
    %p49 = por %p47, %p48
    %p50 = scmp.ne.s32.totalorder %s36, %s37
    %p51 = scmp.eq.s32.totalorder %s15, 1
    %p52 = por %p50, %p51
    %p54 = scmp.ne.s32.totalorder %s37, %s53
    %p55 = scmp.eq.s32.totalorder %s15, 0
    %p56 = por %p54, %p55
    %s57 = smul.u32 %s17, 2
    %s58 = ssub.s32 %s57, 1
    %p59 = scmp.gt.s32.totalorder %s58, 0
    %s60 = scalar_select %p59, %s58, 0
    %s61 = smul.u32 %s24, 2
    %s62 = ssub.s32 %s61, 1
    %p63 = scmp.gt.s32.totalorder %s62, 0
    %s64 = scalar_select %p63, %s62, 0
    %s65 = ssub.s32 %s16, %s28
    %s66 = ssub.s32 %s60, %s64
    %s67 = sor.u32 %s65, %s66
    %p68 = scmp.eq.s32.totalorder %s67, 0
    %s70 = sadd.s32 %s69, 1
    %s71 = scalar_select %p68, %s69, %s70
    %p74 = pneg %p68
    %p75 = scmp.eq.s32.totalorder %s9, 1
    %p76 = por %p74, %p75
    %p77 = scmp.ne.s32.totalorder %s69, %s72
    %p78 = scmp.eq.s32.totalorder %s9, 0
    %p79 = por %p77, %p78
    %p80 = scmp.ne.s32.totalorder %s69, %s72
    %p81 = scmp.eq.s32.totalorder %s14, 1
    %p82 = por %p80, %p81
    %p83 = scmp.ne.s32.totalorder %s72, %s73
    %p84 = scmp.eq.s32.totalorder %s14, 0
    %p85 = por %p83, %p84
    %p86 = scmp.ne.s32.totalorder %s72, %s73
    %p87 = scmp.eq.s32.totalorder %s15, 1
    %p88 = por %p86, %p87
    %p90 = scmp.ne.s32.totalorder %s73, %s89
    %p91 = scmp.eq.s32.totalorder %s15, 0
    %p92 = por %p90, %p91
    %s93 = sadd.s32 %s17, 1
    %s94 = smul.u32 %s93, 2
    %p95 = scmp.lt.s32.totalorder %s94, 1
    %s96 = scalar_select %p95, %s94, 1
    %s97 = sadd.s32 %s24, 1
    %s98 = smul.u32 %s97, 2
    %p99 = scmp.lt.s32.totalorder %s98, 1
    %s100 = scalar_select %p99, %s98, 1
    %s101 = ssub.s32 %s16, %s28
    %s102 = ssub.s32 %s96, %s100
    %s103 = sor.u32 %s101, %s102
    %p104 = scmp.eq.s32.totalorder %s103, 0
    %s106 = sadd.s32 %s105, 1
    %s107 = scalar_select %p104, %s105, %s106
    %p110 = pneg %p104
    %p111 = scmp.eq.s32.totalorder %s9, 1
    %p112 = por %p110, %p111
    %p113 = scmp.ne.s32.totalorder %s105, %s108
    %p114 = scmp.eq.s32.totalorder %s9, 0
    %p115 = por %p113, %p114
    %p116 = scmp.ne.s32.totalorder %s105, %s108
    %p117 = scmp.eq.s32.totalorder %s14, 1
    %p118 = por %p116, %p117
    %p119 = scmp.ne.s32.totalorder %s108, %s109
    %p120 = scmp.eq.s32.totalorder %s14, 0
    %p121 = por %p119, %p120
    %p122 = scmp.ne.s32.totalorder %s108, %s109
    %p123 = scmp.eq.s32.totalorder %s15, 1
    %p124 = por %p122, %p123
    %p126 = scmp.ne.s32.totalorder %s109, %s125
    %p127 = scmp.eq.s32.totalorder %s15, 0
    %p128 = por %p126, %p127
    %s129 = ssub.s32 %s16, %s28
    %s130 = ssub.s32 %s17, %s24
    %s131 = sor.u32 %s129, %s130
    %p132 = scmp.eq.s32.totalorder %s131, 0
    %s134 = sadd.s32 %s133, 1
    %s135 = scalar_select %p132, %s133, %s134
    %p138 = pneg %p132
    %p139 = scmp.eq.s32.totalorder %s9, 1
    %p140 = por %p138, %p139
    %p141 = scmp.ne.s32.totalorder %s133, %s136
    %p142 = scmp.eq.s32.totalorder %s9, 0
    %p143 = por %p141, %p142
    %p144 = scmp.ne.s32.totalorder %s133, %s136
    %p145 = scmp.eq.s32.totalorder %s14, 1
    %p146 = por %p144, %p145
    %p147 = scmp.ne.s32.totalorder %s136, %s137
    %p148 = scmp.eq.s32.totalorder %s14, 0
    %p149 = por %p147, %p148
    %p150 = scmp.ne.s32.totalorder %s136, %s137
    %p151 = scmp.eq.s32.totalorder %s15, 1
    %p152 = por %p150, %p151
    %p154 = scmp.ne.s32.totalorder %s137, %s153
    %p155 = scmp.eq.s32.totalorder %s15, 0
    %p156 = por %p154, %p155
    %p157 = scmp.le.s32.totalorder 1, %s9
    %p158 = scmp.lt.s32.totalorder %s9, 3
    %p159 = pnand %p157, %p158
    %p160 = pneg %p159
    // Predicated region
    $region9: #{sobelxy.1} parent=5 // pred_check
      _
    $region10: #{sobelxy.1} parent=5 // pred_check_branch
      %162 = sbr.rel (%p159) target = $region12
    $region11: #{sobelxy.1} parent=5 // pred_region
      %s163 = ssub.s32 %s9, 1
    $region12: #{sobelxy.1} parent=5 // pred_fallthru
      _
    %p164 = scmp.lt.s32.totalorder %s9, 2
    // Predicated region
    $region13: #{sobelxy.1} parent=5 // pred_check
      %p165 = pneg %p164
    $region14: #{sobelxy.1} parent=5 // pred_check_branch
      %167 = sbr.rel (%p165) target = $region16
    $region15: #{sobelxy.1} parent=5 // pred_region
      // Predicated region
      $region17: #{sobelxy.1} parent=15 // pred_check
        %p168 = pneg %p43
      $region18: #{sobelxy.1} parent=15 // pred_check_branch
        %170 = sbr.rel (%p168) target = $region20
      $region19: #{sobelxy.1} parent=15 // pred_region
        %s171 = smul.u32 2, %s17
        %p172 = scmp.lt.s32.totalorder %s16, 1
        %s173 = scalar_select %p172, %s16, 1
        %p174 = scmp.lt.s32.totalorder %s171, 1
        %s175 = scalar_select %p174, %s171, 1
        %s176 = smul.addr %s173, 2
        %s177 = sadd.s32 %s175, %s176
        %s178 = smul.addr %s177, 8
        %s179 = scalar_lea.vmem %s0, %s178
        %s180 = smul.u32 2, %s17
      $region20: #{sobelxy.1} parent=15 // pred_fallthru
        _
      // Predicated region
      $region21: #{sobelxy.1} parent=15 // pred_check
        %p181 = pneg %p79
      $region22: #{sobelxy.1} parent=15 // pred_check_branch
        %183 = sbr.rel (%p181) target = $region24
      $region23: #{sobelxy.1} parent=15 // pred_region
        %s184 = smul.u32 %s17, 2
        %s185 = ssub.s32 %s184, 1
        %p186 = scmp.gt.s32.totalorder %s185, 0
        %s187 = scalar_select %p186, %s185, 0
        %p188 = scmp.lt.s32.totalorder %s16, 1
        %s189 = scalar_select %p188, %s16, 1
        %p190 = scmp.lt.s32.totalorder %s187, 1
        %s191 = scalar_select %p190, %s187, 1
        %s192 = smul.addr %s189, 2
        %s193 = sadd.s32 %s191, %s192
        %s194 = smul.addr %s193, 8
        %s195 = scalar_lea.vmem %s1, %s194
        %s196 = smul.u32 %s17, 2
        %s197 = ssub.s32 %s196, 1
        %p198 = scmp.gt.s32.totalorder %s197, 0
        %s199 = scalar_select %p198, %s197, 0
      $region24: #{sobelxy.1} parent=15 // pred_fallthru
        _
      // Predicated region
      $region25: #{sobelxy.1} parent=15 // pred_check
        %p200 = pneg %p115
      $region26: #{sobelxy.1} parent=15 // pred_check_branch
        %202 = sbr.rel (%p200) target = $region28
      $region27: #{sobelxy.1} parent=15 // pred_region
        %s203 = sadd.s32 %s17, 1
        %s204 = smul.u32 %s203, 2
        %p205 = scmp.lt.s32.totalorder %s204, 1
        %s206 = scalar_select %p205, %s204, 1
        %p207 = scmp.lt.s32.totalorder %s16, 1
        %s208 = scalar_select %p207, %s16, 1
        %p209 = scmp.lt.s32.totalorder %s206, 1
        %s210 = scalar_select %p209, %s206, 1
        %s211 = smul.addr %s208, 2
        %s212 = sadd.s32 %s210, %s211
        %s213 = smul.addr %s212, 8
        %s214 = scalar_lea.vmem %s2, %s213
        %s215 = sadd.s32 %s17, 1
        %s216 = smul.u32 %s215, 2
        %p217 = scmp.lt.s32.totalorder %s216, 1
        %s218 = scalar_select %p217, %s216, 1
      $region28: #{sobelxy.1} parent=15 // pred_fallthru
        _
    $region16: #{sobelxy.1} parent=5 // pred_fallthru
      _
    %p219 = scmp.le.s32.totalorder 1, %s9
    %p220 = scmp.lt.s32.totalorder %s9, 3
    %p221 = pnand %p219, %p220
    %p222 = pneg %p221
    // Predicated region
    $region29: #{sobelxy.1} parent=5 // pred_check
      _
    $region30: #{sobelxy.1} parent=5 // pred_check_branch
      %224 = sbr.rel (%p221) target = $region32
    $region31: #{sobelxy.1} parent=5 // pred_region
      %s225 = ssub.s32 %s9, 1
      %s226 = smul.u32 2, %s19
      %p227 = scmp.lt.s32.totalorder %s18, 1
      %s228 = scalar_select %p227, %s18, 1
      %p229 = scmp.lt.s32.totalorder %s226, 1
      %s230 = scalar_select %p229, %s226, 1
      %s231 = smul.addr %s228, 2
      %s232 = sadd.s32 %s230, %s231
      %s233 = smul.addr %s232, 8
      %s234 = scalar_lea.vmem %s0, %s233
      %p235 = pneg %p49
      %p236 = pneg %p46
      %s237 = smul.u32 %s19, 2
      %s238 = ssub.s32 %s237, 1
      %p239 = scmp.gt.s32.totalorder %s238, 0
      %s240 = scalar_select %p239, %s238, 0
      %p241 = scmp.lt.s32.totalorder %s18, 1
      %s242 = scalar_select %p241, %s18, 1
      %p243 = scmp.lt.s32.totalorder %s240, 1
      %s244 = scalar_select %p243, %s240, 1
      %s245 = smul.addr %s242, 2
      %s246 = sadd.s32 %s244, %s245
      %s247 = smul.addr %s246, 8
      %s248 = scalar_lea.vmem %s1, %s247
      %p249 = pneg %p85
      %p250 = pneg %p82
      %s251 = sadd.s32 %s19, 1
      %s252 = smul.u32 %s251, 2
      %p253 = scmp.lt.s32.totalorder %s252, 1
      %s254 = scalar_select %p253, %s252, 1
      %p255 = scmp.lt.s32.totalorder %s18, 1
      %s256 = scalar_select %p255, %s18, 1
      %p257 = scmp.lt.s32.totalorder %s254, 1
      %s258 = scalar_select %p257, %s254, 1
      %s259 = smul.addr %s256, 2
      %s260 = sadd.s32 %s258, %s259
      %s261 = smul.addr %s260, 8
      %s262 = scalar_lea.vmem %s2, %s261
      %p263 = pneg %p121
      %p264 = pneg %p118
      %p265 = pneg %p149
      %p266 = pneg %p146
      %s267 = smul.u32 2, %s19
      %p268 = scmp.lt.s32.totalorder %s18, 1
      %s269 = scalar_select %p268, %s18, 1
      %p270 = scmp.lt.s32.totalorder %s267, 1
      %s271 = scalar_select %p270, %s267, 1
      %s272 = smul.addr %s269, 2
      %s273 = sadd.s32 %s271, %s272
      %s274 = smul.addr %s273, 8
      %s275 = scalar_lea.vmem %s3, %s274
      %s276 = smul.u32 2, %s19
      %p277 = scmp.lt.s32.totalorder %s18, 1
      %s278 = scalar_select %p277, %s18, 1
      %p279 = scmp.lt.s32.totalorder %s276, 1
      %s280 = scalar_select %p279, %s276, 1
      %s281 = smul.addr %s278, 2
      %s282 = sadd.s32 %s280, %s281
      %s283 = smul.addr %s282, 8
      %s284 = scalar_lea.vmem %s0, %s283
      %s285 = smul.u32 2, %s19
      %s286 = smul.u32 %s19, 2
      %s287 = ssub.s32 %s286, 1
      %p288 = scmp.gt.s32.totalorder %s287, 0
      %s289 = scalar_select %p288, %s287, 0
      %p290 = scmp.lt.s32.totalorder %s18, 1
      %s291 = scalar_select %p290, %s18, 1
      %p292 = scmp.lt.s32.totalorder %s289, 1
      %s293 = scalar_select %p292, %s289, 1
      %s294 = smul.addr %s291, 2
      %s295 = sadd.s32 %s293, %s294
      %s296 = smul.addr %s295, 8
      %s297 = scalar_lea.vmem %s1, %s296
      %s298 = smul.u32 %s19, 2
      %s299 = ssub.s32 %s298, 1
      %p300 = scmp.gt.s32.totalorder %s299, 0
      %s301 = scalar_select %p300, %s299, 0
      %s302 = sadd.s32 %s19, 1
      %s303 = smul.u32 %s302, 2
      %p304 = scmp.lt.s32.totalorder %s303, 1
      %s305 = scalar_select %p304, %s303, 1
      %p306 = scmp.lt.s32.totalorder %s18, 1
      %s307 = scalar_select %p306, %s18, 1
      %p308 = scmp.lt.s32.totalorder %s305, 1
      %s309 = scalar_select %p308, %s305, 1
      %s310 = smul.addr %s307, 2
      %s311 = sadd.s32 %s309, %s310
      %s312 = smul.addr %s311, 8
      %s313 = scalar_lea.vmem %s2, %s312
      %s314 = sadd.s32 %s19, 1
      %s315 = smul.u32 %s314, 2
      %p316 = scmp.lt.s32.totalorder %s315, 1
      %s317 = scalar_select %p316, %s315, 1
      %s318 = smul.u32 2, %s19
      %p319 = scmp.lt.s32.totalorder %s18, 1
      %s320 = scalar_select %p319, %s18, 1
      %p321 = scmp.lt.s32.totalorder %s318, 1
      %s322 = scalar_select %p321, %s318, 1
      %s323 = smul.addr %s320, 2
      %s324 = sadd.s32 %s322, %s323
      %s325 = smul.addr %s324, 8
      %s326 = scalar_lea.vmem %s3, %s325
      %s327 = smul.u32 2, %s19
      %v328 = vld [vmem:[%s284] sm:$0xff]
      %v329 = vld [vmem:[%s284 + $0x8] sm:$0xff]
      %p330 = scmp.gt.s32.totalorder %s19, 0
      %v331 = vld [vmem:[%s297 + $0x7] sm:$0x1]
      %s332 = scalar_select %p330, 1, 0
      %v333 = vstv %s332
      %vm334 = vcmp.eq.s32.totalorder %v333, 1
      %v335 = vsel %vm334, %v331, 0.0
      %p336 = scmp.lt.s32.totalorder %s19, 0
      %v337 = vld [vmem:[%s313] sm:$0x1]
      %s338 = scalar_select %p336, 1, 0
      %v339 = vstv %s338
      %vm340 = vcmp.eq.s32.totalorder %v339, 1
      %v341 = vsel %vm340, %v337, 0.0
      %v342 = vlaneseq
      %v343 = vshrl.u32 %v342, 7
      %v344 = vadd.s32 %v343, 8
      %v345 = vlaneseq
      %v346 = vand.u32 %v345, 127
      %vm347 = vcmp.eq.s32.totalorder %v343, 0
      %vm348 = vcmp.eq.s32.totalorder %v344, 0
      %v349 = vrot.slane %v328, 7
      %v350 = vrot.slane %v329, 7
      %vm351 = vcmp.lt.s32.totalorder %v343, 1
      %v352 = vsel %vm351, %v349, %v350
      %v353 = vsel %vm351, %v350, %v349
      %v354 = vlaneseq
      %v355 = vshrl.u32 %v354, 7
      %v356 = vsub.s32 0, %v355
      %v357 = vrot.slane %v335, %v356
      %v358 = vsel %vm347, %v357, %v353
      %v359 = vsel %vm348, %v357, %v352
      %vm360 = vcmp.eq.s32.totalorder %v343, 15
      %vm361 = vcmp.eq.s32.totalorder %v344, 15
      %v362 = vrot.slane %v328, 1
      %v363 = vrot.slane %v329, 1
      %vm364 = vcmp.lt.s32.totalorder %v343, 7
      %v365 = vsel %vm364, %v362, %v363
      %v366 = vsel %vm364, %v363, %v362
      %v367 = vlaneseq
      %v368 = vshrl.u32 %v367, 7
      %v369 = vsub.s32 0, %v368
      %v370 = vrot.slane %v341, %v369
      %v371 = vsel %vm360, %v370, %v365
      %v372 = vsel %vm361, %v370, %v366
      %v373 = vmul.f32 %v328, 2.0
      %v374 = vmul.f32 %v329, 2.0
      %v375 = vadd.f32 %v358, %v373
      %v376 = vadd.f32 %v359, %v374
      %v377 = vadd.f32 %v375, %v371
      %v378 = vadd.f32 %v376, %v372
      %v379 = vsub.f32 %v358, %v371
      %v380 = vsub.f32 %v359, %v372
      %vm381 = vcmp.eq.s32.totalorder %v346, 0
      %382 = vrot.lane.b32.xlu0 %v377, 1
      %v383 = vpop.permute.xlu0 %382
      %384 = vrot.lane.b32.xlu0 %v378, 1
      %v385 = vpop.permute.xlu0 %384
      %v386 = vsel %vm381, 0.0, %v383
      %v387 = vsel %vm381, 0.0, %v385
      %vm388 = vcmp.eq.s32.totalorder %v346, 127
      %389 = vrot.lane.b32.xlu0 %v377, 127
      %v390 = vpop.permute.xlu0 %389
      %391 = vrot.lane.b32.xlu0 %v378, 127
      %v392 = vpop.permute.xlu0 %391
      %v393 = vsel %vm388, 0.0, %v390
      %v394 = vsel %vm388, 0.0, %v392
      %395 = vrot.lane.b32.xlu0 %v379, 1
      %v396 = vpop.permute.xlu0 %395
      %397 = vrot.lane.b32.xlu0 %v380, 1
      %v398 = vpop.permute.xlu0 %397
      %v399 = vsel %vm381, 0.0, %v396
      %v400 = vsel %vm381, 0.0, %v398
      %401 = vrot.lane.b32.xlu0 %v379, 127
      %v402 = vpop.permute.xlu0 %401
      %403 = vrot.lane.b32.xlu0 %v380, 127
      %v404 = vpop.permute.xlu0 %403
      %v405 = vsel %vm388, 0.0, %v402
      %v406 = vsel %vm388, 0.0, %v404
      %v407 = vsub.f32 %v393, %v386
      %v408 = vsub.f32 %v394, %v387
      %v409 = vmul.f32 %v379, 2.0
      %v410 = vmul.f32 %v380, 2.0
      %v411 = vadd.f32 %v399, %v409
      %v412 = vadd.f32 %v400, %v410
      %v413 = vadd.f32 %v411, %v405
      %v414 = vadd.f32 %v412, %v406
      %v415 = vadd.f32 %v407, %v413
      %v416 = vadd.f32 %v408, %v414
      %417 = vst [vmem:[%s326] sm:$0xff] %v415
      %418 = vst [vmem:[%s326 + $0x8] sm:$0xff] %v416
      %s419 = smul.u32 2, %s19
      %p420 = scmp.lt.s32.totalorder %s18, 1
      %s421 = scalar_select %p420, %s18, 1
      %p422 = scmp.lt.s32.totalorder %s419, 1
      %s423 = scalar_select %p422, %s419, 1
      %s424 = smul.addr %s421, 2
      %s425 = sadd.s32 %s423, %s424
      %s426 = smul.addr %s425, 8
      %s427 = scalar_lea.vmem %s3, %s426
      // Predicated region
      $region33: #{sobelxy.1} parent=31 // pred_check
        %p428 = pneg %p146
      $region34: #{sobelxy.1} parent=31 // pred_check_branch
        %430 = sbr.rel (%p428) target = $region36
      $region35: #{sobelxy.1} parent=31 // pred_region
        %s431 = smul.u32 2, %s19
      $region36: #{sobelxy.1} parent=31 // pred_fallthru
        _
    $region32: #{sobelxy.1} parent=5 // pred_fallthru
      _
    %p432 = scmp.le.s32.totalorder 2, %s9
    // Predicated region
    $region37: #{sobelxy.1} parent=5 // pred_check
      %p433 = pneg %p432
    $region38: #{sobelxy.1} parent=5 // pred_check_branch
      %435 = sbr.rel (%p433) target = $region40
    $region39: #{sobelxy.1} parent=5 // pred_region
      %s436 = ssub.s32 %s9, 2
      // Predicated region
      $region41: #{sobelxy.1} parent=39 // pred_check
        %p437 = pneg %p152
      $region42: #{sobelxy.1} parent=39 // pred_check_branch
        %439 = sbr.rel (%p437) target = $region44
      $region43: #{sobelxy.1} parent=39 // pred_region
        %s440 = smul.u32 2, %s21
        %p441 = scmp.lt.s32.totalorder %s20, 1
        %s442 = scalar_select %p441, %s20, 1
        %p443 = scmp.lt.s32.totalorder %s440, 1
        %s444 = scalar_select %p443, %s440, 1
        %s445 = smul.addr %s442, 2
        %s446 = sadd.s32 %s444, %s445
        %s447 = smul.addr %s446, 8
        %s448 = scalar_lea.vmem %s3, %s447
      $region44: #{sobelxy.1} parent=39 // pred_fallthru
        _
    $region40: #{sobelxy.1} parent=5 // pred_fallthru
      _
  $region6: #{sobelxy.1} parent=0 // loop_footer
    %s13 = sadd.s32 1, %s9
  $region7: #{sobelxy.1} parent=0 // loop_footer_branch
    %8 = sbr.rel target = $region3
  $region8: #{sobelxy.1} parent=0 // loop_exit
    _

</llo_original>
